<compile_context>
chip_gen: v7x
topology: tpu7x:2x2x1
jax: 0.10.0
libtpu: 0.0.40
codegen_flags: <defaults>
</compile_context>

<pallas_src>
import functools

import jax
import jax.numpy as jnp
from jax import lax
from jax.experimental import pallas as pl
from jax.experimental.pallas import tpu as pltpu


def _round_up(x, m):
    return ((x + m - 1) // m) * m


def _cdiv(a, b):
    return -(-a // b)


def _vmem_budget_bytes():
    """Returns (input double-buffer budget, vmem_limit) per TPU generation."""
    try:
        info = pltpu.get_tpu_info()
        cap = getattr(info, "vmem_capacity_bytes", None)
    except Exception:
        cap = None
    if cap is None:
        # Unknown generation: numbers safe everywhere (including v7x).
        return 20 * 1024 * 1024, 32 * 1024 * 1024
    if cap >= 96 * 1024 * 1024:
        # v5e / v6e: 128 MiB physical VMEM -> let tiles grow.
        return 48 * 1024 * 1024, 64 * 1024 * 1024
    # v7x: 64 MiB physical VMEM (32 MiB scoped default) -> stay conservative.
    return 20 * 1024 * 1024, 48 * 1024 * 1024


def _joints_mse_kernel(*refs, tile_rows, total_rows, use_target_weight,
                       needs_mask, lane_fold):
    if use_target_weight:
        pred_ref, gt_ref, w_ref, out_ref = refs
    else:
        pred_ref, gt_ref, out_ref = refs

    hw = pred_ref.shape[-1]

    w = None
    if use_target_weight:
        w = w_ref[...].astype(jnp.float32)                        # (TR, 1)

    valid = None
    if needs_mask:
        i = pl.program_id(0)
        row = lax.broadcasted_iota(jnp.int32, (tile_rows, 1), 0)
        valid = (i * tile_rows + row) < total_rows

    def col_partial(p, g):
        d = p.astype(jnp.float32) - g.astype(jnp.float32)
        if needs_mask:
            # Overhang rows of the last block are unspecified (may be NaN);
            # zero the difference BEFORE weighting/squaring (0 * NaN = NaN).
            d = jnp.where(valid, d, 0.0)
        if use_target_weight:
            d = d * w                                 # (p - g)*w == p*w - g*w
        d2 = d * d
        # (TR, C) -> (TR//8, 8, C) is layout preserving; the axis-0 sum is
        # pure cross-vreg VPU adds (no XLU, no scalar dependency).
        return jnp.sum(d2.reshape(tile_rows // 8, 8, d2.shape[-1]), axis=0)

    if lane_fold:
        # Fold the lane-block axis too: accumulator is a single (8, 128)
        # vreg, writeback is one unmasked lane-dense 4 KiB store per step.
        acc = col_partial(pred_ref[:, 0:128], gt_ref[:, 0:128])
        for k in range(1, hw // 128):
            lo = k * 128
            acc = acc + col_partial(pred_ref[:, lo:lo + 128],
                                    gt_ref[:, lo:lo + 128])
        out_ref[...] = acc
    else:
        out_ref[...] = col_partial(pred_ref[...], gt_ref[...])


def joints_mse_loss(output, target, target_weight, *, use_target_weight=True):
    B, J, H, W = output.shape
    R = B * J
    HW = H * W

    # Contiguous reshapes only — no transpose, no HBM copy.
    pred = output.reshape(R, HW)
    gt = target.reshape(R, HW)

    itemsize = output.dtype.itemsize
    align = max(8, 32 // itemsize)          # f32 -> 8, bf16 -> 16, int8 -> 32
    r_up = _round_up(R, align)

    budget, vmem_limit = _vmem_budget_bytes()

    # Bytes of VMEM consumed per tiled row: 2 inputs x 2 pipeline buffers,
    # plus the lane-padded (TR, 1) f32 weight block if used.
    bytes_per_row = 2 * 2 * HW * itemsize
    if use_target_weight:
        bytes_per_row += 2 * 128 * 4
    tr_cap_budget = budget // bytes_per_row
    # Soft cap: per-input blocks beyond ~8 MiB are past the roofline plateau
    # (~1 MiB); this only bounds unrolled code size.
    tr_cap_block = (8 * 1024 * 1024) // (HW * itemsize)
    tr_cap = max(align, (min(tr_cap_budget, tr_cap_block) // align) * align)

    # Balanced tiling: make the last tile (nearly) full instead of
    # cap-then-remainder; bump G to even (when G > 1) for a clean megacore
    # split on v7x.
    G = max(1, _cdiv(r_up, tr_cap))
    if G > 1 and G % 2:
        G += 1
    TR = _round_up(_cdiv(r_up, G), align)
    G = _cdiv(R, TR)
    needs_mask = (G * TR != R)

    lane_fold = (HW % 128 == 0)
    out_cols = 128 if lane_fold else HW

    in_specs = [
        pl.BlockSpec((TR, HW), lambda i: (i, 0)),
        pl.BlockSpec((TR, HW), lambda i: (i, 0)),
    ]
    args = [pred, gt]
    if use_target_weight:
        w = target_weight.reshape(R, 1).astype(jnp.float32)
        if G * TR != R:
            w = jnp.pad(w, ((0, G * TR - R), (0, 0)))     # tiny, zero padded
        # Per-step (TR, 1) block: a contiguous TR*4-byte DMA, trivially
        # hidden under the multi-MiB input DMAs.
        in_specs.append(pl.BlockSpec((TR, 1), lambda i: (i, 0)))
        args.append(w)

    kernel = functools.partial(
        _joints_mse_kernel,
        tile_rows=TR,
        total_rows=R,
        use_target_weight=use_target_weight,
        needs_mask=needs_mask,
        lane_fold=lane_fold,
    )

    partials = pl.pallas_call(
        kernel,
        out_shape=jax.ShapeDtypeStruct((G, 8, out_cols), jnp.float32),
        grid=(G,),
        in_specs=in_specs,
        out_specs=pl.BlockSpec((None, 8, out_cols), lambda i: (i, 0, 0)),
        compiler_params=pltpu.CompilerParams(
            dimension_semantics=("parallel",),
            vmem_limit_bytes=vmem_limit),
    )(*args)

    # loss = sum_j 0.5 * mean_{B,HW}(err^2) / J == 0.5/(J*B*HW) * total_sum
    scale = 0.5 / float(J * B * HW)
    return jnp.sum(partials) * scale


def _reference_loss(output, target, target_weight, use_target_weight=True):
    """Pure-JAX reference mirroring the PyTorch forward exactly."""
    B, J, H, W = output.shape
    pred = output.reshape(B, J, -1)
    gt = target.reshape(B, J, -1)
    loss = 0.0
    for idx in range(J):
        hp = pred[:, idx, :]
        hg = gt[:, idx, :]
        if use_target_weight:
            w = target_weight[:, idx]          # (B, 1)
            hp = hp * w
            hg = hg * w
        loss += 0.5 * jnp.mean((hp - hg) ** 2)
    return loss / J


if __name__ == "__main__":
    key = jax.random.PRNGKey(0)
    k1, k2, k3, k4, k5, k6, k7, k8 = jax.random.split(key, 8)

    # Case 1: B*J multiple of 8 (no mask path), f32, with target weights.
    B, J, H, W = 2, 4, 16, 16
    output = jax.random.normal(k1, (B, J, H, W), dtype=jnp.float32)
    target = jax.random.normal(k2, (B, J, H, W), dtype=jnp.float32)
    target_weight = jax.random.uniform(k3, (B, J, 1), dtype=jnp.float32)

    loss = jax.block_until_ready(
        joints_mse_loss(output, target, target_weight, use_target_weight=True))
    ref = _reference_loss(output, target, target_weight, use_target_weight=True)
    assert jnp.allclose(loss, ref, rtol=1e-5, atol=1e-5), (loss, ref)

    # Case 2: no target weighting.
    loss_nw = jax.block_until_ready(
        joints_mse_loss(output, target, target_weight, use_target_weight=False))
    ref_nw = _reference_loss(output, target, target_weight,
                             use_target_weight=False)
    assert jnp.allclose(loss_nw, ref_nw, rtol=1e-5, atol=1e-5), (loss_nw, ref_nw)

    # Case 3: ragged row count (B*J = 15 -> masked overhang rows).
    B2, J2, H2, W2 = 3, 5, 16, 16
    output2 = jax.random.normal(k4, (B2, J2, H2, W2), dtype=jnp.float32)
    target2 = jax.random.normal(k5, (B2, J2, H2, W2), dtype=jnp.float32)
    target_weight2 = jax.random.uniform(k6, (B2, J2, 1), dtype=jnp.float32)

    loss2 = jax.block_until_ready(
        joints_mse_loss(output2, target2, target_weight2,
                        use_target_weight=True))
    ref2 = _reference_loss(output2, target2, target_weight2,
                           use_target_weight=True)
    assert jnp.allclose(loss2, ref2, rtol=1e-5, atol=1e-5), (loss2, ref2)

    # Case 4: bf16 heatmaps (halved HBM traffic), f32 accumulation in-kernel.
    B3, J3, H3, W3 = 4, 4, 16, 16
    output3 = jax.random.normal(k7, (B3, J3, H3, W3), dtype=jnp.float32)
    target3 = jax.random.normal(k8, (B3, J3, H3, W3), dtype=jnp.float32)
    target_weight3 = jax.random.uniform(k3, (B3, J3, 1), dtype=jnp.float32)
    out_bf = output3.astype(jnp.bfloat16)
    tgt_bf = target3.astype(jnp.bfloat16)

    loss_bf = jax.block_until_ready(
        joints_mse_loss(out_bf, tgt_bf, target_weight3, use_target_weight=True))
    ref_bf = _reference_loss(out_bf.astype(jnp.float32),
                             tgt_bf.astype(jnp.float32),
                             target_weight3, use_target_weight=True)
    assert jnp.allclose(loss_bf, ref_bf, rtol=1e-3, atol=1e-5), (loss_bf, ref_bf)

    print("KERNEL_OK")
</pallas_src>

<mosaic_0001>
module attributes {stable_mosaic.version = 11 : i64} {
  func.func @_joints_mse_kernel(%arg0: i32, %arg1: memref<8x256xf32, #tpu.memory_space<vmem>>, %arg2: memref<8x256xf32, #tpu.memory_space<vmem>>, %arg3: memref<8x1xf32, #tpu.memory_space<vmem>>, %arg4: memref<1x8x128xf32, #tpu.memory_space<vmem>>) attributes {dimension_semantics = [#tpu.dimension_semantics<parallel>], iteration_bounds = array<i64: 1>, scalar_prefetch = 0 : i64, scratch_operands = 0 : i64, tpu.core_type = #tpu.core_type<tc>, window_params = [{transform_indices = @transform_0, window_bounds = array<i64: 8, 256>}, {transform_indices = @transform_1, window_bounds = array<i64: 8, 256>}, {transform_indices = @transform_2, window_bounds = array<i64: 8, 1>}, {transform_indices = @transform_3, window_bounds = array<i64: 1, 8, 128>}]} {
    %c0 = arith.constant 0 : index
    %c0_0 = arith.constant 0 : index
    %0 = vector.load %arg3[%c0, %c0_0] : memref<8x1xf32, #tpu.memory_space<vmem>>, vector<8x1xf32>
    %c0_1 = arith.constant 0 : index
    %c0_2 = arith.constant 0 : index
    %1 = vector.load %arg1[%c0_1, %c0_2] : memref<8x256xf32, #tpu.memory_space<vmem>>, vector<8x128xf32>
    %c0_3 = arith.constant 0 : index
    %c0_4 = arith.constant 0 : index
    %2 = vector.load %arg2[%c0_3, %c0_4] : memref<8x256xf32, #tpu.memory_space<vmem>>, vector<8x128xf32>
    %3 = arith.subf %1, %2 : vector<8x128xf32>
    %4 = vector.broadcast %0 : vector<8x1xf32> to vector<8x128xf32>
    %5 = arith.mulf %3, %4 : vector<8x128xf32>
    %6 = arith.mulf %5, %5 : vector<8x128xf32>
    %7 = vector.shape_cast %6 : vector<8x128xf32> to vector<1x8x128xf32>
    %cst = arith.constant dense<0.000000e+00> : vector<8x128xf32>
    %8 = vector.multi_reduction <add>, %7, %cst [0] : vector<1x8x128xf32> to vector<8x128xf32>
    %c0_5 = arith.constant 0 : index
    %c128 = arith.constant 128 : index
    %9 = vector.load %arg1[%c0_5, %c128] : memref<8x256xf32, #tpu.memory_space<vmem>>, vector<8x128xf32>
    %c0_6 = arith.constant 0 : index
    %c128_7 = arith.constant 128 : index
    %10 = vector.load %arg2[%c0_6, %c128_7] : memref<8x256xf32, #tpu.memory_space<vmem>>, vector<8x128xf32>
    %11 = arith.subf %9, %10 : vector<8x128xf32>
    %12 = vector.broadcast %0 : vector<8x1xf32> to vector<8x128xf32>
    %13 = arith.mulf %11, %12 : vector<8x128xf32>
    %14 = arith.mulf %13, %13 : vector<8x128xf32>
    %15 = vector.shape_cast %14 : vector<8x128xf32> to vector<1x8x128xf32>
    %cst_8 = arith.constant dense<0.000000e+00> : vector<8x128xf32>
    %16 = vector.multi_reduction <add>, %15, %cst_8 [0] : vector<1x8x128xf32> to vector<8x128xf32>
    %17 = arith.addf %8, %16 : vector<8x128xf32>
    %c0_9 = arith.constant 0 : index
    %c0_10 = arith.constant 0 : index
    %c0_11 = arith.constant 0 : index
    %18 = vector.load %arg4[%c0_9, %c0_10, %c0_11] : memref<1x8x128xf32, #tpu.memory_space<vmem>>, vector<1x8x128xf32>
    %19 = vector.shape_cast %18 : vector<1x8x128xf32> to vector<8x128xf32>
    %20 = vector.shape_cast %17 : vector<8x128xf32> to vector<1x8x128xf32>
    tpu.vector_store %arg4[%c0_9, %c0_10, %c0_11], %20 {strides = array<i32>} : memref<1x8x128xf32, #tpu.memory_space<vmem>>, vector<1x8x128xf32>,
    return
  }
  func.func @transform_0(%arg0: i32) -> (i32, i32) {
    %c0_i32 = arith.constant 0 : i32
    %c0_i32_0 = arith.constant 0 : i32
    return %arg0, %c0_i32 : i32, i32
  }
  func.func @transform_1(%arg0: i32) -> (i32, i32) {
    %c0_i32 = arith.constant 0 : i32
    %c0_i32_0 = arith.constant 0 : i32
    return %arg0, %c0_i32 : i32, i32
  }
  func.func @transform_2(%arg0: i32) -> (i32, i32) {
    %c0_i32 = arith.constant 0 : i32
    %c0_i32_0 = arith.constant 0 : i32
    return %arg0, %c0_i32 : i32, i32
  }
  func.func @transform_3(%arg0: i32) -> (i32, i32, i32) {
    %c0_i32 = arith.constant 0 : i32
    %c0_i32_0 = arith.constant 0 : i32
    %c0_i32_1 = arith.constant 0 : i32
    return %arg0, %c0_i32, %c0_i32_0 : i32, i32, i32
  }
}

</mosaic_0001>

<llo_original>
// kernel: tpu_custom_call.1
$region0: #{tpu_custom_call.1}
  #allocation0 [shape = 'u32[]', space=smem, size = 0x4, offset = 0x4, fixed_abs, tag = 'smem constant byte address 0x4 - core index']
  #allocation1 [shape = 'u32[144,128]{1,0:T(1,128)}', space=vmem, size = 0x12000, scoped, tag = 'internal scratch']
  %s0 = inlined_call_operand.hbm [shape: f32[8,256], index: 0, kind: input, shape index: {}]
  %s1 = inlined_call_operand.hbm [shape: f32[8,256], index: 1, kind: input, shape index: {}]
  %s2 = inlined_call_operand.vmem [shape: f32[8,1], index: 2, kind: input, shape index: {}]
  %s3 = inlined_call_operand.hbm [shape: f32[1,8,128], index: 3, kind: output, shape index: {}]
  %s4 = sld [smem:[#allocation0]]
  $region30: #{tpu_custom_call.1} parent=0
    _
  %s6 = ssub.s32 1, %s4
  %s7 = scalar_select 0, %s6, %s4
  $region1: #{tpu_custom_call.1} parent=0
    #allocation2 [shape = 'u8[8192]{0}', space=vmem, size = 0x2000, scoped, tag = 'input window, operand 0, single buffered']
    #allocation3 [shape = 's32[1]{0}', space=sflag, size = 0x4, scoped, tag = 'scoped memory for tpu_custom_call.1']
    #allocation4 [shape = 's32[1]{0}', space=sflag, size = 0x4, scoped, tag = 'scoped memory for tpu_custom_call.1']
    #allocation5 [shape = 'u8[8192]{0}', space=vmem, size = 0x2000, scoped, tag = 'input window, operand 1, single buffered']
    #allocation6 [shape = 's32[1]{0}', space=sflag, size = 0x4, scoped, tag = 'scoped memory for tpu_custom_call.1']
    #allocation7 [shape = 'u8[4096]{0}', space=vmem, size = 0x1000, scoped, tag = 'output window, operand 0, single buffered']
    %8 = vsyncpa [#allocation3], 0
    %9 = vsyncpa [#allocation6], 0
    %10 = vsyncpa [#allocation4], 0
    // Predicated region
    $region2: #{tpu_custom_call.1} parent=1 // pred_check
      _
    $region3: #{tpu_custom_call.1} parent=1 // pred_check_branch
      %12 = sbr.rel (0) target = $region5
    $region4: #{tpu_custom_call.1} parent=1 // pred_region
      %s14 = ssub.s32 256, 256
      %15 = vsyncadd [#allocation3], %s14
      %s17 = sshll.u32 [#allocation2], 4
      %s18 = int_to_ptr.vmem [resolvable:$true] %s17
      %20 = dma.hbm_to_vmem [thread:$0]  %s0, 256, %s18, [#allocation3]
    $region5: #{tpu_custom_call.1} parent=1 // pred_fallthru
      _
    // Predicated region
    $region6: #{tpu_custom_call.1} parent=1 // pred_check
      _
    $region7: #{tpu_custom_call.1} parent=1 // pred_check_branch
      %22 = sbr.rel (0) target = $region9
    $region8: #{tpu_custom_call.1} parent=1 // pred_region
      %s24 = ssub.s32 256, 256
      %25 = vsyncadd [#allocation6], %s24
      %s27 = sshll.u32 [#allocation5], 4
      %s28 = int_to_ptr.vmem [resolvable:$true] %s27
      %30 = dma.hbm_to_vmem [thread:$0]  %s1, 256, %s28, [#allocation6]
    $region9: #{tpu_custom_call.1} parent=1 // pred_fallthru
      _
    // Predicated region
    $region10: #{tpu_custom_call.1} parent=1 // pred_check
      _
    $region11: #{tpu_custom_call.1} parent=1 // pred_check_branch
      %32 = sbr.rel (0) target = $region13
    $region12: #{tpu_custom_call.1} parent=1 // pred_region
      _
    $region13: #{tpu_custom_call.1} parent=1 // pred_fallthru
      _
    // Predicated region
    $region14: #{tpu_custom_call.1} parent=1 // pred_check
      _
    $region15: #{tpu_custom_call.1} parent=1 // pred_check_branch
      %34 = sbr.rel (0) target = $region17
    $region16: #{tpu_custom_call.1} parent=1 // pred_region
      %35 = dma.done [#allocation3], 256
    $region17: #{tpu_custom_call.1} parent=1 // pred_fallthru
      _
    // Predicated region
    $region18: #{tpu_custom_call.1} parent=1 // pred_check
      _
    $region19: #{tpu_custom_call.1} parent=1 // pred_check_branch
      %37 = sbr.rel (0) target = $region21
    $region20: #{tpu_custom_call.1} parent=1 // pred_region
      %38 = dma.done [#allocation6], 256
    $region21: #{tpu_custom_call.1} parent=1 // pred_fallthru
      _
    %v39 = vld [vmem:[%s2] sm:$0xff]
    %v40 = vld [vmem:[#allocation2] sm:$0xff]
    %v41 = vld [vmem:[#allocation5] sm:$0xff]
    %v42 = vsub.f32 %v40, %v41
    %44 = vset.pattern.permute.xlu0 0
    %45 = vperm.xlu0 %44, %v39
    %v46 = vpop.permute.xlu0 %45
    %v48 = vmul.f32 %v42, %v46
    %v49 = vmul.f32 %v48, %v48
    %v50 = vadd.f32 %v49, 0.0
    %v51 = vld [vmem:[#allocation2 + $0x8] sm:$0xff]
    %v52 = vld [vmem:[#allocation5 + $0x8] sm:$0xff]
    %v53 = vsub.f32 %v51, %v52
    %v54 = vmul.f32 %v53, %v46
    %v55 = vmul.f32 %v54, %v54
    %v56 = vadd.f32 %v55, 0.0
    %v57 = vadd.f32 %v50, %v56
    %58 = vst [vmem:[#allocation7] sm:$0xff] %v57
    // Predicated region
    $region22: #{tpu_custom_call.1} parent=1 // pred_check
      _
    $region23: #{tpu_custom_call.1} parent=1 // pred_check_branch
      %60 = sbr.rel (0) target = $region25
    $region24: #{tpu_custom_call.1} parent=1 // pred_region
      %s62 = ssub.s32 128, 128
      %63 = vsyncadd [#allocation4], %s62
      %s65 = sshll.u32 [#allocation7], 4
      %s66 = int_to_ptr.vmem [resolvable:$true] %s65
      %68 = dma.vmem_to_hbm [thread:$0]  %s66, 128, %s3, [#allocation4]
    $region25: #{tpu_custom_call.1} parent=1 // pred_fallthru
      _
    // Predicated region
    $region26: #{tpu_custom_call.1} parent=1 // pred_check
      _
    $region27: #{tpu_custom_call.1} parent=1 // pred_check_branch
      %70 = sbr.rel (0) target = $region29
    $region28: #{tpu_custom_call.1} parent=1 // pred_region
      %71 = dma.done [#allocation4], 128
    $region29: #{tpu_custom_call.1} parent=1 // pred_fallthru
      _
    %72 = vsyncpa [#allocation3], 1
    %73 = vsyncpa [#allocation6], 1
    %74 = vsyncpa [#allocation4], 1

</llo_original>
